<compile_context>
chip_gen: v7x
topology: tpu7x:2x2x1
jax: 0.10.0
libtpu: 0.0.40
codegen_flags: <defaults>
</compile_context>

<pallas_src>
import functools

import jax
import jax.numpy as jnp
from jax.experimental import pallas as pl
from jax.experimental.pallas import tpu as pltpu


def _round_up(x: int, m: int) -> int:
    return ((x + m - 1) // m) * m


def _linear_kernel_single_k(x_ref, w_ref, b_ref, o_ref):
    """Whole K in one tile: fused matmul + bias, direct store (no scratch).

    x_ref: (tm, K)   w_ref: (K, tn)   b_ref: (1, tn)   o_ref: (tm, tn)
    """
    acc = jnp.dot(x_ref[...], w_ref[...], preferred_element_type=jnp.float32)
    o_ref[...] = (acc + b_ref[...]).astype(o_ref.dtype)


def _linear_kernel_tiled(x_ref, w_ref, b_ref, o_ref, acc_ref):
    """One (tm, tn) output tile; K-reduction over grid axis 2.

    x_ref:   (tm, tk)  activation tile
    w_ref:   (tk, tn)  weight tile, (In, Out) layout -> Out on lanes
    b_ref:   (1,  tn)  bias tile (same block for every K step)
    o_ref:   (tm, tn)  output tile
    acc_ref: (tm, tn)  f32 VMEM accumulator (persists across K steps)
    """
    k = pl.program_id(2)

    @pl.when(k == 0)
    def _():
        acc_ref[...] = jnp.zeros_like(acc_ref)

    acc_ref[...] += jnp.dot(
        x_ref[...], w_ref[...], preferred_element_type=jnp.float32
    )

    @pl.when(k == pl.num_programs(2) - 1)
    def _():
        # Bias added exactly once, at finalize.
        o_ref[...] = (acc_ref[...] + b_ref[...]).astype(o_ref.dtype)


@functools.partial(jax.jit, static_argnames=("tm", "tn", "tk"))
def linear_forward(x, weight, bias, *, tm=256, tn=256, tk=512):
    """y = x @ weight.T + bias via a tiled Pallas TPU matmul."""
    B, In = x.shape
    Out, In_w = weight.shape
    assert In == In_w and bias.shape == (Out,)

    # Pre-transpose the weight once XLA-side: (Out, In) -> (In, Out).
    w_t = weight.T

    # Clamp tile sizes for small problems; keep lane dims 128-aligned and the
    # sublane (batch) dim 8-aligned.
    tm = min(tm, _round_up(B, 8))
    tn = min(tn, _round_up(Out, 128))
    tk = min(tk, _round_up(In, 128))

    Bp = _round_up(B, tm)
    Inp = _round_up(In, tk)
    Outp = _round_up(Out, tn)

    # Zero-pad to tile boundaries: every block full, output stores lane-dense.
    x_p = jnp.pad(x, ((0, Bp - B), (0, Inp - In)))
    w_p = jnp.pad(w_t, ((0, Inp - In), (0, Outp - Out)))
    b_p = jnp.pad(bias, (0, Outp - Out)).reshape(1, Outp)

    n_k = Inp // tk

    itemsize = jnp.dtype(x.dtype).itemsize
    cost = pl.CostEstimate(
        flops=2 * Bp * Inp * Outp,
        transcendentals=0,
        bytes_accessed=itemsize * (Bp * Inp + Inp * Outp + Bp * Outp + Outp),
    )
    compiler_params = lambda sem: pltpu.CompilerParams(
        dimension_semantics=sem,
        vmem_limit_bytes=48 * 1024 * 1024,  # within v7x's 64 MiB physical VMEM
    )

    if n_k == 1:
        # Fast path: whole reduction in one tile; no scratch, no K grid axis.
        out = pl.pallas_call(
            _linear_kernel_single_k,
            out_shape=jax.ShapeDtypeStruct((Bp, Outp), x.dtype),
            grid=(Bp // tm, Outp // tn),
            in_specs=[
                pl.BlockSpec((tm, Inp), lambda i, j: (i, 0)),   # x tile
                pl.BlockSpec((Inp, tn), lambda i, j: (0, j)),   # W^T tile
                pl.BlockSpec((1, tn), lambda i, j: (0, j)),     # bias
            ],
            out_specs=pl.BlockSpec((tm, tn), lambda i, j: (i, j)),
            compiler_params=compiler_params(("parallel", "parallel")),
            cost_estimate=cost,
        )(x_p, w_p, b_p)
    else:
        out = pl.pallas_call(
            _linear_kernel_tiled,
            out_shape=jax.ShapeDtypeStruct((Bp, Outp), x.dtype),
            grid=(Bp // tm, Outp // tn, n_k),
            in_specs=[
                pl.BlockSpec((tm, tk), lambda i, j, k: (i, k)),  # x tile
                pl.BlockSpec((tk, tn), lambda i, j, k: (k, j)),  # W^T tile
                pl.BlockSpec((1, tn), lambda i, j, k: (0, j)),   # bias (K-inv)
            ],
            out_specs=pl.BlockSpec((tm, tn), lambda i, j, k: (i, j)),
            scratch_shapes=[pltpu.VMEM((tm, tn), jnp.float32)],
            compiler_params=compiler_params(
                ("parallel", "parallel", "arbitrary")
            ),
            cost_estimate=cost,
        )(x_p, w_p, b_p)

    # Strip padding.
    return out[:B, :Out]


if __name__ == "__main__":
    # Small shapes consistent with the module: batch=8, input_size=32, output_size=16.
    batch, input_size, output_size = 8, 32, 16

    key = jax.random.PRNGKey(0)
    kx, kw, kb = jax.random.split(key, 3)

    x = jax.random.normal(kx, (batch, input_size), dtype=jnp.float32)
    # Mimic nn.Linear's uniform(-1/sqrt(in), 1/sqrt(in)) init, deterministically.
    bound = 1.0 / (input_size ** 0.5)
    weight = jax.random.uniform(
        kw, (output_size, input_size), dtype=jnp.float32, minval=-bound, maxval=bound
    )
    bias = jax.random.uniform(
        kb, (output_size,), dtype=jnp.float32, minval=-bound, maxval=bound
    )

    y = linear_forward(x, weight, bias)
    jax.block_until_ready(y)

    y_ref = x @ weight.T + bias
    assert y.shape == (batch, output_size)
    assert jnp.allclose(y, y_ref, atol=1e-5, rtol=1e-5)

    # Larger shape exercising the full (M, N, K) tiled path: multi-step K
    # reduction, padded N, bias added only at finalize.
    B2, In2, Out2 = 512, 1024, 384
    k2x, k2w, k2b = jax.random.split(jax.random.PRNGKey(1), 3)
    x2 = jax.random.normal(k2x, (B2, In2), dtype=jnp.float32)
    w2 = jax.random.normal(k2w, (Out2, In2), dtype=jnp.float32) * 0.02
    b2 = jax.random.normal(k2b, (Out2,), dtype=jnp.float32)

    y2 = linear_forward(x2, w2, b2)
    jax.block_until_ready(y2)
    y2_ref = x2 @ w2.T + b2
    assert y2.shape == (B2, Out2)
    assert jnp.allclose(y2, y2_ref, atol=2e-2, rtol=2e-2)

    print("KERNEL_OK")
</pallas_src>

<mosaic_0001>
module attributes {stable_mosaic.version = 11 : i64} {
  func.func @_linear_kernel_single_k(%arg0: i32, %arg1: i32, %arg2: memref<8x128xf32, #tpu.memory_space<vmem>>, %arg3: memref<128x128xf32, #tpu.memory_space<vmem>>, %arg4: memref<1x128xf32, #tpu.memory_space<vmem>>, %arg5: memref<8x128xf32, #tpu.memory_space<vmem>>) attributes {dimension_semantics = [#tpu.dimension_semantics<parallel>, #tpu.dimension_semantics<parallel>], iteration_bounds = array<i64: 1, 1>, scalar_prefetch = 0 : i64, scratch_operands = 0 : i64, tpu.core_type = #tpu.core_type<tc>, window_params = [{transform_indices = @transform_0, window_bounds = array<i64: 8, 128>}, {transform_indices = @transform_1, window_bounds = array<i64: 128, 128>}, {transform_indices = @transform_2, window_bounds = array<i64: 1, 128>}, {transform_indices = @transform_3, window_bounds = array<i64: 8, 128>}]} {
    %c0 = arith.constant 0 : index
    %c0_0 = arith.constant 0 : index
    %0 = vector.load %arg2[%c0, %c0_0] : memref<8x128xf32, #tpu.memory_space<vmem>>, vector<8x128xf32>
    %c0_1 = arith.constant 0 : index
    %c0_2 = arith.constant 0 : index
    %1 = vector.load %arg3[%c0_1, %c0_2] : memref<128x128xf32, #tpu.memory_space<vmem>>, vector<128x128xf32>
    %cst = arith.constant dense<0.000000e+00> : vector<8x128xf32>
    %2 = tpu.matmul %0, %1, %cst {dimension_numbers = #tpu.dot_dimension_numbers<[1], [0], [0], [1], [0, 0, 1, 1], [], []>} : vector<8x128xf32>, vector<128x128xf32>, vector<8x128xf32> -> vector<8x128xf32>
    %c0_3 = arith.constant 0 : index
    %c0_4 = arith.constant 0 : index
    %3 = vector.load %arg4[%c0_3, %c0_4] : memref<1x128xf32, #tpu.memory_space<vmem>>, vector<1x128xf32>
    %4 = vector.broadcast %3 : vector<1x128xf32> to vector<8x128xf32>
    %5 = arith.addf %2, %4 : vector<8x128xf32>
    %c0_5 = arith.constant 0 : index
    %c0_6 = arith.constant 0 : index
    %6 = vector.load %arg5[%c0_5, %c0_6] : memref<8x128xf32, #tpu.memory_space<vmem>>, vector<8x128xf32>
    tpu.vector_store %arg5[%c0_5, %c0_6], %5 {strides = array<i32>} : memref<8x128xf32, #tpu.memory_space<vmem>>, vector<8x128xf32>,
    return
  }
  func.func @transform_0(%arg0: i32, %arg1: i32) -> (i32, i32) {
    %c0_i32 = arith.constant 0 : i32
    %c0_i32_0 = arith.constant 0 : i32
    return %arg0, %c0_i32 : i32, i32
  }
  func.func @transform_1(%arg0: i32, %arg1: i32) -> (i32, i32) {
    %c0_i32 = arith.constant 0 : i32
    %c0_i32_0 = arith.constant 0 : i32
    return %c0_i32, %arg1 : i32, i32
  }
  func.func @transform_2(%arg0: i32, %arg1: i32) -> (i32, i32) {
    %c0_i32 = arith.constant 0 : i32
    %c0_i32_0 = arith.constant 0 : i32
    return %c0_i32, %arg1 : i32, i32
  }
  func.func @transform_3(%arg0: i32, %arg1: i32) -> (i32, i32) {
    %c0_i32 = arith.constant 0 : i32
    return %arg0, %arg1 : i32, i32
  }
}

</mosaic_0001>

<llo_original>
// kernel: linear_forward.1
$region0: #{linear_forward.1}
  #allocation0 [shape = 'u32[]', space=smem, size = 0x4, offset = 0x4, fixed_abs, tag = 'smem constant byte address 0x4 - core index']
  #allocation1 [shape = 'u32[144,128]{1,0:T(1,128)}', space=vmem, size = 0x12000, scoped, tag = 'internal scratch']
  %s0 = inlined_call_operand.vmem [shape: f32[8,128], index: 0, kind: input, shape index: {}]
  %s1 = inlined_call_operand.vmem [shape: f32[128,128], index: 1, kind: input, shape index: {}]
  %s2 = inlined_call_operand.vmem [shape: f32[1,128], index: 2, kind: input, shape index: {}]
  %s3 = inlined_call_operand.hbm [shape: f32[8,128], index: 3, kind: output, shape index: {}]
  %s4 = sld [smem:[#allocation0]]
  $region22: #{linear_forward.1} parent=0
    _
  %s6 = ssub.s32 1, %s4
  %s7 = scalar_select 0, %s6, %s4
  $region1: #{linear_forward.1} parent=0
    #allocation2 [shape = 'u8[4096]{0}', space=vmem, size = 0x1000, scoped, tag = 'output window, operand 0, single buffered']
    #allocation3 [shape = 's32[1]{0}', space=sflag, size = 0x4, scoped, tag = 'scoped memory for linear_forward.1']
    %8 = vsyncpa [#allocation3], 0
    // Predicated region
    $region2: #{linear_forward.1} parent=1 // pred_check
      _
    $region3: #{linear_forward.1} parent=1 // pred_check_branch
      %10 = sbr.rel (0) target = $region5
    $region4: #{linear_forward.1} parent=1 // pred_region
      _
    $region5: #{linear_forward.1} parent=1 // pred_fallthru
      _
    // Predicated region
    $region6: #{linear_forward.1} parent=1 // pred_check
      _
    $region7: #{linear_forward.1} parent=1 // pred_check_branch
      %12 = sbr.rel (0) target = $region9
    $region8: #{linear_forward.1} parent=1 // pred_region
      _
    $region9: #{linear_forward.1} parent=1 // pred_fallthru
      _
    // Predicated region
    $region10: #{linear_forward.1} parent=1 // pred_check
      _
    $region11: #{linear_forward.1} parent=1 // pred_check_branch
      %14 = sbr.rel (0) target = $region13
    $region12: #{linear_forward.1} parent=1 // pred_region
      _
    $region13: #{linear_forward.1} parent=1 // pred_fallthru
      _
    %v15 = vld [vmem:[%s0] sm:$0xff]
    %v16 = vld [vmem:[%s1] sm:$0xff]
    %v17 = vld [vmem:[%s1 + $0x8] sm:$0xff]
    %v18 = vld [vmem:[%s1 + $0x10] sm:$0xff]
    %v19 = vld [vmem:[%s1 + $0x18] sm:$0xff]
    %v20 = vld [vmem:[%s1 + $0x20] sm:$0xff]
    %v21 = vld [vmem:[%s1 + $0x28] sm:$0xff]
    %v22 = vld [vmem:[%s1 + $0x30] sm:$0xff]
    %v23 = vld [vmem:[%s1 + $0x38] sm:$0xff]
    %v24 = vld [vmem:[%s1 + $0x40] sm:$0xff]
    %v25 = vld [vmem:[%s1 + $0x48] sm:$0xff]
    %v26 = vld [vmem:[%s1 + $0x50] sm:$0xff]
    %v27 = vld [vmem:[%s1 + $0x58] sm:$0xff]
    %v28 = vld [vmem:[%s1 + $0x60] sm:$0xff]
    %v29 = vld [vmem:[%s1 + $0x68] sm:$0xff]
    %v30 = vld [vmem:[%s1 + $0x70] sm:$0xff]
    %v31 = vld [vmem:[%s1 + $0x78] sm:$0xff]
    %v32 = vld [vmem:[%s2] sm:$0x1]
    %v34 = vlaneseq
    %v35 = vshrl.u32 %v34, 7
    %v36 = vsub.s32 0, %v35
    %v37 = vrot.slane %v32, %v36
    %39 = vmatprep.subr.mxu0 0.0
    %40 = vmatpush1.msra.mxu0 %v16
    %41 = vmatprep.subr.mxu0 0.0
    %42 = vmatpush1.msra.mxu0 %v17
    %43 = vmatprep.subr.mxu0 0.0
    %44 = vmatpush1.msra.mxu0 %v18
    %45 = vmatprep.subr.mxu0 0.0
    %46 = vmatpush1.msra.mxu0 %v19
    %47 = vmatprep.subr.mxu0 0.0
    %48 = vmatpush1.msra.mxu0 %v20
    %49 = vmatprep.subr.mxu0 0.0
    %50 = vmatpush1.msra.mxu0 %v21
    %51 = vmatprep.subr.mxu0 0.0
    %52 = vmatpush1.msra.mxu0 %v22
    %53 = vmatprep.subr.mxu0 0.0
    %54 = vmatpush1.msra.mxu0 %v23
    %55 = vmatprep.subr.mxu0 0.0
    %56 = vmatpush1.msra.mxu0 %v24
    %57 = vmatprep.subr.mxu0 0.0
    %58 = vmatpush1.msra.mxu0 %v25
    %59 = vmatprep.subr.mxu0 0.0
    %60 = vmatpush1.msra.mxu0 %v26
    %61 = vmatprep.subr.mxu0 0.0
    %62 = vmatpush1.msra.mxu0 %v27
    %63 = vmatprep.subr.mxu0 0.0
    %64 = vmatpush1.msra.mxu0 %v28
    %65 = vmatprep.subr.mxu0 0.0
    %66 = vmatpush1.msra.mxu0 %v29
    %67 = vmatprep.subr.mxu0 0.0
    %68 = vmatpush1.msra.mxu0 %v30
    %69 = vmatprep.subr.mxu0 0.0
    %70 = vmatpush1.msra.mxu0 %v31
    %71 = vmatprep.subr.mxu0 0.0
    %72 = vmatpush1.msra.mxu0 0.0
    %73 = vmatprep.subr.mxu0 0.0
    %74 = vmatpush1.msra.mxu0 0.0
    %75 = vmatprep.subr.mxu0 0.0
    %76 = vmatpush1.msra.mxu0 0.0
    %77 = vmatprep.subr.mxu0 0.0
    %78 = vmatpush1.msra.mxu0 0.0
    %79 = vmatprep.subr.mxu0 0.0
    %80 = vmatpush1.msra.mxu0 0.0
    %81 = vmatprep.subr.mxu0 0.0
    %82 = vmatpush1.msra.mxu0 0.0
    %83 = vmatprep.subr.mxu0 0.0
    %84 = vmatpush1.msra.mxu0 0.0
    %85 = vmatprep.subr.mxu0 0.0
    %86 = vmatpush1.msra.mxu0 0.0
    %87 = vmatprep.subr.mxu0 0.0
    %88 = vmatpush1.msra.mxu0 0.0
    %89 = vmatprep.subr.mxu0 0.0
    %90 = vmatpush1.msra.mxu0 0.0
    %91 = vmatprep.subr.mxu0 0.0
    %92 = vmatpush1.msra.mxu0 0.0
    %93 = vmatprep.subr.mxu0 0.0
    %94 = vmatpush1.msra.mxu0 0.0
    %95 = vmatprep.subr.mxu0 0.0
    %96 = vmatpush1.msra.mxu0 0.0
    %97 = vmatprep.subr.mxu0 0.0
    %98 = vmatpush1.msra.mxu0 0.0
    %99 = vmatprep.subr.mxu0 0.0
    %100 = vmatpush1.msra.mxu0 0.0
    %101 = vmatprep.subr.mxu0 0.0
    %102 = vmatpush1.msra.mxu0 0.0
    %103 = vmatprep.mubr.f32.mxu0 0.0
    %104 = vmatmul.mubr.f32.gmra.mrb[0].mxu0 %v15
    %v105 = vpop.f32.mrb[0].mxu0
    %v106 = vadd.f32 %v37, %v105
    %v107 = vpop.f32.mrb[0].mxu0
    %108 = vdwg.mxu0
    %109 = vst [vmem:[#allocation2] sm:$0xff] %v106
    // Predicated region
    $region14: #{linear_forward.1} parent=1 // pred_check
      _
    $region15: #{linear_forward.1} parent=1 // pred_check_branch
      %111 = sbr.rel (0) target = $region17
    $region16: #{linear_forward.1} parent=1 // pred_region
      %s113 = ssub.s32 128, 128
      %114 = vsyncadd [#allocation3], %s113
      %s116 = sshll.u32 [#allocation2], 4
      %s117 = int_to_ptr.vmem [resolvable:$true] %s116
      %119 = dma.vmem_to_hbm [thread:$0]  %s117, 128, %s3, [#allocation3]
    $region17: #{linear_forward.1} parent=1 // pred_fallthru
      _
    // Predicated region
    $region18: #{linear_forward.1} parent=1 // pred_check
      _
    $region19: #{linear_forward.1} parent=1 // pred_check_branch
      %121 = sbr.rel (0) target = $region21
    $region20: #{linear_forward.1} parent=1 // pred_region
      %122 = dma.done [#allocation3], 128
    $region21: #{linear_forward.1} parent=1 // pred_fallthru
      _
    %123 = vsyncpa [#allocation3], 1

</llo_original>
